<compile_context>
chip_gen: v6e
topology: v6e:2x2x1
jax: 0.10.0
libtpu: 0.0.40
codegen_flags: <defaults>
</compile_context>

<pallas_src>
import jax
import jax.numpy as jnp
from jax.experimental import pallas as pl
from jax.experimental.pallas import tpu as pltpu

_LANE = 128


def _mpjpe_kernel(pred_ref, gt_ref, out_ref):
    # pred_ref, gt_ref: (D, J, TB) tiles in VMEM (native dtype);
    # out_ref: (1, TB) f32 in VMEM.
    d_dim, j_dim, _ = pred_ref.shape
    p = pred_ref[...].astype(jnp.float32)
    g = gt_ref[...].astype(jnp.float32)
    diff = p - g
    sq = diff * diff                                   # (D, J, TB) on VPU
    # Reduce over the small coord axis D with unrolled slice-adds (no XLU
    # lane reduce over a 3-wide masked axis).
    ssum = sq[0]
    for d in range(1, d_dim):
        ssum = ssum + sq[d]                            # (J, TB)
    per_joint = jnp.sqrt(ssum)                         # EUP sqrt, (J, TB)
    # Per-sample mean over joints: sublane-axis sum * precomputed 1/J.
    inv_j = jnp.float32(1.0 / j_dim)
    out_ref[...] = (jnp.sum(per_joint, axis=0, keepdims=True) * inv_j
                    ).astype(out_ref.dtype)


def pose_loss(pred, gt):
    """MPJPE. pred, gt: (B, J, D) -> (B,) float32."""
    assert pred.shape == gt.shape and pred.ndim == 3
    B, J, D = pred.shape

    # Lane-dense layout: batch last.
    pred_t = jnp.transpose(pred, (2, 1, 0))            # (D, J, B)
    gt_t = jnp.transpose(gt, (2, 1, 0))

    # Batch tile: target ~2 MiB of f32 per input tile (>=85% of measured HBM
    # roofline) while staying well inside v7x's 64 MiB VMEM with two
    # double-buffered inputs; always a multiple of 128 lanes.
    bytes_per_col = J * D * 4
    tb_budget = max(_LANE, ((2 << 20) // max(bytes_per_col, 1)) // _LANE * _LANE)
    b_ceil = pl.cdiv(B, _LANE) * _LANE
    tb = min(tb_budget, b_ceil)
    B_pad = pl.cdiv(B, tb) * tb
    if B_pad != B:
        pad = ((0, 0), (0, 0), (0, B_pad - B))
        pred_t = jnp.pad(pred_t, pad)
        gt_t = jnp.pad(gt_t, pad)

    out = pl.pallas_call(
        _mpjpe_kernel,
        out_shape=jax.ShapeDtypeStruct((1, B_pad), jnp.float32),
        grid=(B_pad // tb,),
        in_specs=[
            pl.BlockSpec((D, J, tb), lambda b: (0, 0, b)),
            pl.BlockSpec((D, J, tb), lambda b: (0, 0, b)),
        ],
        out_specs=pl.BlockSpec((1, tb), lambda b: (0, b)),
        compiler_params=pltpu.CompilerParams(
            dimension_semantics=("parallel",)),
    )(pred_t, gt_t)
    return out[0, :B]


if __name__ == "__main__":
    key = jax.random.PRNGKey(0)

    def ref_loss(p, g):
        p32 = p.astype(jnp.float32)
        g32 = g.astype(jnp.float32)
        return jnp.mean(jnp.sqrt(jnp.sum((p32 - g32) ** 2, axis=-1)), axis=-1)

    # Small canonical shape: batch=2, joints=16, coords=3 (xyz).
    k1, k2 = jax.random.split(key)
    B, J, D = 2, 16, 3
    pred = jax.random.normal(k1, (B, J, D), dtype=jnp.float32)
    gt = jax.random.normal(k2, (B, J, D), dtype=jnp.float32)
    out = jax.block_until_ready(pose_loss(pred, gt))
    assert out.shape == (B,)
    assert jnp.allclose(out, ref_loss(pred, gt), atol=1e-5, rtol=1e-5)

    # Exercise the batch-padding path (B not a multiple of the 128-lane tile).
    k3, k4 = jax.random.split(k2)
    B2 = 257
    pred2 = jax.random.normal(k3, (B2, J, D), dtype=jnp.float32)
    gt2 = jax.random.normal(k4, (B2, J, D), dtype=jnp.float32)
    out2 = jax.block_until_ready(pose_loss(pred2, gt2))
    assert out2.shape == (B2,)
    assert jnp.allclose(out2, ref_loss(pred2, gt2), atol=1e-5, rtol=1e-5)

    print("KERNEL_OK")
</pallas_src>

<mosaic_0001>
module attributes {stable_mosaic.version = 11 : i64} {
  func.func @_mpjpe_kernel(%arg0: i32, %arg1: memref<3x16x128xf32, #tpu.memory_space<vmem>>, %arg2: memref<3x16x128xf32, #tpu.memory_space<vmem>>, %arg3: memref<1x128xf32, #tpu.memory_space<vmem>>) attributes {dimension_semantics = [#tpu.dimension_semantics<parallel>], iteration_bounds = array<i64: 1>, scalar_prefetch = 0 : i64, scratch_operands = 0 : i64, tpu.core_type = #tpu.core_type<tc>, window_params = [{transform_indices = @transform_0, window_bounds = array<i64: 3, 16, 128>}, {transform_indices = @transform_1, window_bounds = array<i64: 3, 16, 128>}, {transform_indices = @transform_2, window_bounds = array<i64: 1, 128>}]} {
    %c0 = arith.constant 0 : index
    %c0_0 = arith.constant 0 : index
    %c0_1 = arith.constant 0 : index
    %0 = vector.load %arg1[%c0, %c0_0, %c0_1] : memref<3x16x128xf32, #tpu.memory_space<vmem>>, vector<3x16x128xf32>
    %c0_2 = arith.constant 0 : index
    %c0_3 = arith.constant 0 : index
    %c0_4 = arith.constant 0 : index
    %1 = vector.load %arg2[%c0_2, %c0_3, %c0_4] : memref<3x16x128xf32, #tpu.memory_space<vmem>>, vector<3x16x128xf32>
    %2 = arith.subf %0, %1 : vector<3x16x128xf32>
    %3 = arith.mulf %2, %2 : vector<3x16x128xf32>
    %4 = vector.extract_strided_slice %3 {offsets = [0, 0, 0], sizes = [1, 16, 128], strides = [1, 1, 1]} : vector<3x16x128xf32> to vector<1x16x128xf32>
    %5 = vector.shape_cast %4 : vector<1x16x128xf32> to vector<16x128xf32>
    %6 = vector.extract_strided_slice %3 {offsets = [1, 0, 0], sizes = [1, 16, 128], strides = [1, 1, 1]} : vector<3x16x128xf32> to vector<1x16x128xf32>
    %7 = vector.shape_cast %6 : vector<1x16x128xf32> to vector<16x128xf32>
    %8 = arith.addf %5, %7 : vector<16x128xf32>
    %9 = vector.extract_strided_slice %3 {offsets = [2, 0, 0], sizes = [1, 16, 128], strides = [1, 1, 1]} : vector<3x16x128xf32> to vector<1x16x128xf32>
    %10 = vector.shape_cast %9 : vector<1x16x128xf32> to vector<16x128xf32>
    %11 = arith.addf %8, %10 : vector<16x128xf32>
    %12 = math.sqrt %11 : vector<16x128xf32>
    %cst = arith.constant dense<0.000000e+00> : vector<128xf32>
    %13 = vector.multi_reduction <add>, %12, %cst [0] : vector<16x128xf32> to vector<128xf32>
    %14 = vector.shape_cast %13 : vector<128xf32> to vector<1x128xf32>
    %cst_5 = arith.constant 6.250000e-02 : f32
    %15 = vector.broadcast %cst_5 : f32 to vector<1x128xf32>
    %16 = arith.mulf %14, %15 : vector<1x128xf32>
    %c0_6 = arith.constant 0 : index
    %c0_7 = arith.constant 0 : index
    %17 = vector.load %arg3[%c0_6, %c0_7] : memref<1x128xf32, #tpu.memory_space<vmem>>, vector<1x128xf32>
    tpu.vector_store %arg3[%c0_6, %c0_7], %16 {strides = array<i32>} : memref<1x128xf32, #tpu.memory_space<vmem>>, vector<1x128xf32>,
    return
  }
  func.func @transform_0(%arg0: i32) -> (i32, i32, i32) {
    %c0_i32 = arith.constant 0 : i32
    %c0_i32_0 = arith.constant 0 : i32
    %c0_i32_1 = arith.constant 0 : i32
    return %c0_i32, %c0_i32_0, %arg0 : i32, i32, i32
  }
  func.func @transform_1(%arg0: i32) -> (i32, i32, i32) {
    %c0_i32 = arith.constant 0 : i32
    %c0_i32_0 = arith.constant 0 : i32
    %c0_i32_1 = arith.constant 0 : i32
    return %c0_i32, %c0_i32_0, %arg0 : i32, i32, i32
  }
  func.func @transform_2(%arg0: i32) -> (i32, i32) {
    %c0_i32 = arith.constant 0 : i32
    %c0_i32_0 = arith.constant 0 : i32
    return %c0_i32, %arg0 : i32, i32
  }
}

</mosaic_0001>

<llo_original>
// kernel: tpu_custom_call.1
$region0: #{tpu_custom_call.1}
  #allocation0 [shape = 'u32[]', space=smem, size = 0x4, offset = 0x4, fixed_abs, tag = 'smem constant byte address 0x4 - core index']
  #allocation1 [shape = 'u32[144,128]{1,0:T(1,128)}', space=vmem, size = 0x12000, scoped, tag = 'internal scratch']
  %s0 = inlined_call_operand.hbm [shape: f32[3,16,128], index: 0, kind: input, shape index: {}]
  %s1 = inlined_call_operand.hbm [shape: f32[3,16,128], index: 1, kind: input, shape index: {}]
  %s2 = inlined_call_operand.hbm [shape: f32[1,128], index: 2, kind: output, shape index: {}]
  %s3 = sld [smem:[#allocation0]]
  $region26: #{tpu_custom_call.1} parent=0
    _
  %s5 = ssub.s32 1, %s3
  %s6 = scalar_select 0, %s5, %s3
  $region1: #{tpu_custom_call.1} parent=0
    #allocation2 [shape = 'u8[24576]{0}', space=vmem, size = 0x6000, scoped, tag = 'input window, operand 0, single buffered']
    #allocation3 [shape = 's32[1]{0}', space=sflag, size = 0x4, scoped, tag = 'scoped memory for tpu_custom_call.1']
    #allocation4 [shape = 's32[1]{0}', space=sflag, size = 0x4, scoped, tag = 'scoped memory for tpu_custom_call.1']
    #allocation5 [shape = 'u8[24576]{0}', space=vmem, size = 0x6000, scoped, tag = 'input window, operand 1, single buffered']
    #allocation6 [shape = 's32[1]{0}', space=sflag, size = 0x4, scoped, tag = 'scoped memory for tpu_custom_call.1']
    #allocation7 [shape = 'u8[512]{0}', space=vmem, size = 0x400, scoped, tag = 'output window, operand 0, single buffered']
    %7 = vsyncpa [#allocation3], 0
    %8 = vsyncpa [#allocation6], 0
    %9 = vsyncpa [#allocation4], 0
    // Predicated region
    $region2: #{tpu_custom_call.1} parent=1 // pred_check
      _
    $region3: #{tpu_custom_call.1} parent=1 // pred_check_branch
      %11 = sbr.rel (0) target = $region5
    $region4: #{tpu_custom_call.1} parent=1 // pred_region
      %s13 = ssub.s32 768, 768
      %14 = vsyncadd [#allocation3], %s13
      %s15 = sshll.u32 [#allocation2], 4
      %s16 = int_to_ptr.vmem [resolvable:$true] %s15
      %21 = dma.hbm_to_vmem [thread:$0]  %s0, 768, %s16, [#allocation3], 128, 128, 8
    $region5: #{tpu_custom_call.1} parent=1 // pred_fallthru
      _
    // Predicated region
    $region6: #{tpu_custom_call.1} parent=1 // pred_check
      _
    $region7: #{tpu_custom_call.1} parent=1 // pred_check_branch
      %23 = sbr.rel (0) target = $region9
    $region8: #{tpu_custom_call.1} parent=1 // pred_region
      %s25 = ssub.s32 768, 768
      %26 = vsyncadd [#allocation6], %s25
      %s27 = sshll.u32 [#allocation5], 4
      %s28 = int_to_ptr.vmem [resolvable:$true] %s27
      %33 = dma.hbm_to_vmem [thread:$0]  %s1, 768, %s28, [#allocation6], 128, 128, 8
    $region9: #{tpu_custom_call.1} parent=1 // pred_fallthru
      _
    // Predicated region
    $region10: #{tpu_custom_call.1} parent=1 // pred_check
      _
    $region11: #{tpu_custom_call.1} parent=1 // pred_check_branch
      %35 = sbr.rel (0) target = $region13
    $region12: #{tpu_custom_call.1} parent=1 // pred_region
      %36 = dma.done [#allocation3], 768
    $region13: #{tpu_custom_call.1} parent=1 // pred_fallthru
      _
    // Predicated region
    $region14: #{tpu_custom_call.1} parent=1 // pred_check
      _
    $region15: #{tpu_custom_call.1} parent=1 // pred_check_branch
      %38 = sbr.rel (0) target = $region17
    $region16: #{tpu_custom_call.1} parent=1 // pred_region
      %39 = dma.done [#allocation6], 768
    $region17: #{tpu_custom_call.1} parent=1 // pred_fallthru
      _
    %v40 = vld [vmem:[#allocation2] sm:$0xff]
    %v41 = vld [vmem:[#allocation2 + $0x8] sm:$0xff]
    %v42 = vld [vmem:[#allocation2 + $0x10] sm:$0xff]
    %v43 = vld [vmem:[#allocation2 + $0x18] sm:$0xff]
    %v44 = vld [vmem:[#allocation2 + $0x20] sm:$0xff]
    %v45 = vld [vmem:[#allocation2 + $0x28] sm:$0xff]
    %v46 = vld [vmem:[#allocation5] sm:$0xff]
    %v47 = vld [vmem:[#allocation5 + $0x8] sm:$0xff]
    %v48 = vld [vmem:[#allocation5 + $0x10] sm:$0xff]
    %v49 = vld [vmem:[#allocation5 + $0x18] sm:$0xff]
    %v50 = vld [vmem:[#allocation5 + $0x20] sm:$0xff]
    %v51 = vld [vmem:[#allocation5 + $0x28] sm:$0xff]
    %v52 = vsub.f32 %v40, %v46
    %v53 = vsub.f32 %v41, %v47
    %v54 = vsub.f32 %v42, %v48
    %v55 = vsub.f32 %v43, %v49
    %v56 = vsub.f32 %v44, %v50
    %v57 = vsub.f32 %v45, %v51
    %v58 = vmul.f32 %v52, %v52
    %v59 = vmul.f32 %v53, %v53
    %v60 = vmul.f32 %v54, %v54
    %v61 = vmul.f32 %v55, %v55
    %v62 = vmul.f32 %v56, %v56
    %v63 = vmul.f32 %v57, %v57
    %v64 = vadd.f32 %v58, %v60
    %v65 = vadd.f32 %v59, %v61
    %v66 = vadd.f32 %v64, %v62
    %v67 = vadd.f32 %v65, %v63
    %v68 = vrsqrt.pop %v66
    %v69 = vmul.f32 %v66, %v68
    %vm70 = vcmp.eq.f32.partialorder %v66, inf
    %v71 = vsel %vm70, %v66, %v69
    %vm72 = vcmp.eq.f32.partialorder %v66, 0.0
    %v73 = vand.u32 %v66, 2147483648
    %v74 = vsel %vm72, %v73, %v71
    %v75 = vrsqrt.pop %v67
    %v76 = vmul.f32 %v67, %v75
    %vm77 = vcmp.eq.f32.partialorder %v67, inf
    %v78 = vsel %vm77, %v67, %v76
    %vm79 = vcmp.eq.f32.partialorder %v67, 0.0
    %v80 = vand.u32 %v67, 2147483648
    %v81 = vsel %vm79, %v80, %v78
    %v82 = vadd.f32 %v74, %v81
    %v83 = vrot.slane %v82, 4
    %v84 = vadd.f32 %v82, %v83
    %v85 = vrot.slane %v84, 2
    %v86 = vadd.f32 %v84, %v85
    %v87 = vrot.slane %v86, 1
    %v88 = vadd.f32 %v86, %v87
    %v89 = vmul.f32 %v88, 0.0625
    %90 = vst [vmem:[#allocation7] sm:$0x1] %v89
    // Predicated region
    $region18: #{tpu_custom_call.1} parent=1 // pred_check
      _
    $region19: #{tpu_custom_call.1} parent=1 // pred_check_branch
      %92 = sbr.rel (0) target = $region21
    $region20: #{tpu_custom_call.1} parent=1 // pred_region
      %s94 = ssub.s32 16, 16
      %95 = vsyncadd [#allocation4], %s94
      %s97 = sshll.u32 [#allocation7], 4
      %s98 = int_to_ptr.vmem [resolvable:$true] %s97
      %100 = dma.vmem_to_hbm [thread:$0]  %s98, 16, %s2, [#allocation4]
    $region21: #{tpu_custom_call.1} parent=1 // pred_fallthru
      _
    // Predicated region
    $region22: #{tpu_custom_call.1} parent=1 // pred_check
      _
    $region23: #{tpu_custom_call.1} parent=1 // pred_check_branch
      %102 = sbr.rel (0) target = $region25
    $region24: #{tpu_custom_call.1} parent=1 // pred_region
      %103 = dma.done [#allocation4], 16
    $region25: #{tpu_custom_call.1} parent=1 // pred_fallthru
      _
    %104 = vsyncpa [#allocation3], 1
    %105 = vsyncpa [#allocation6], 1
    %106 = vsyncpa [#allocation4], 1

</llo_original>
